<compile_context>
chip_gen: v5e
topology: v5e:2x2
jax: 0.10.0
libtpu: 0.0.40
codegen_flags: <defaults>
</compile_context>

<pallas_src>
import functools

import jax
import jax.numpy as jnp
from jax import lax
from jax.experimental import pallas as pl
from jax.experimental.pallas import tpu as pltpu


def _keep_bool(seed_u32, thr_ref, pool_ref, tile_idx, tile_rows, hw):
    """Regenerate the DropBlock keep-mask (bool, (tile_rows, hw)) for one tile.

    Purely a function of (seed, global element index), so the count pass and
    the apply pass reproduce the identical mask without ever storing it to HBM,
    and different tiles never repeat the same random pattern.
    """
    row = lax.broadcasted_iota(jnp.int32, (tile_rows, hw), 0)
    col = lax.broadcasted_iota(jnp.int32, (tile_rows, hw), 1)
    gidx = (tile_idx * tile_rows + row) * hw + col            # global element id

    # Counter-based PRNG: murmur3 fmix32 of (index, seed).  VPU int ops only.
    h = gidx.astype(jnp.uint32) + seed_u32 * jnp.uint32(0x9E3779B9)
    h = h ^ (h >> 16)
    h = h * jnp.uint32(0x85EBCA6B)
    h = h ^ (h >> 13)
    h = h * jnp.uint32(0xC2B2AE35)
    h = h ^ (h >> 16)
    bits24 = (h & jnp.uint32(0x00FFFFFF)).astype(jnp.int32)

    # Bernoulli(gamma) in integer space; thr is 0 on the border columns, so the
    # seed mask only lives in the valid (mask_h, mask_w) region (== F.pad).
    seeds = (bits24 < thr_ref[...]).astype(jnp.bfloat16)       # (T, HW), 0/1

    # Stride-1 "same" max-pool of a binary mask == (separable sum-pool > 0).
    # Per flattened image row the sum-pool is one matmul with kron(bh, bw);
    # bf16 operands (values are small exact integers), f32 accumulation.
    pooled = jnp.dot(seeds, pool_ref[...], preferred_element_type=jnp.float32)
    return pooled < 0.5                                        # keep = 1 - maxpool


def _count_kernel(seed_ref, thr_ref, pool_ref, count_ref, *, tile_rows, hw, nc_total):
    i = pl.program_id(0)
    keep = _keep_bool(seed_ref[0].astype(jnp.uint32), thr_ref, pool_ref, i, tile_rows, hw)
    # Mask rows of a partial trailing tile so the global count stays exact.
    row = lax.broadcasted_iota(jnp.int32, (tile_rows, hw), 0)
    valid = (i * tile_rows + row) < nc_total
    count_ref[i] = jnp.sum(jnp.where(keep & valid, jnp.float32(1.0), jnp.float32(0.0)))


def _apply_kernel(seed_ref, scale_ref, thr_ref, pool_ref, x_ref, out_ref, *, tile_rows, hw):
    i = pl.program_id(0)
    keep = _keep_bool(seed_ref[0].astype(jnp.uint32), thr_ref, pool_ref, i, tile_rows, hw)
    # Fold the global renorm scale into the select: one select + one multiply.
    scaled_keep = jnp.where(keep, scale_ref[0], jnp.float32(0.0))
    out_ref[...] = (x_ref[...] * scaled_keep).astype(out_ref.dtype)


def dropblock2d(x, *, p=0.1, block_size=7, seed=0, training=True):
    """Functional DropBlock2D matching the PyTorch module's training forward."""
    if p < 0 or p > 1:
        raise ValueError(f"DropBlock probability has to be between 0 and 1, but got {p}")
    if block_size < 1 or block_size % 2 != 1:
        raise ValueError("block_size must be a positive odd integer")
    if not training:
        return x
    # TODO(synk): torch's `inplace` flag has no JAX equivalent (immutable arrays).

    N, C, H, W = x.shape
    pad = block_size // 2
    mask_h = H - block_size + 1
    mask_w = W - block_size + 1
    gamma = p * H * W / (block_size ** 2 * mask_h * mask_w)
    thr = int(min(max(gamma, 0.0), 1.0) * (1 << 24))           # integer Bernoulli threshold

    NC, HW = N * C, H * W
    x2 = x.reshape(NC, HW)                                     # free reshape, lane-dense rows

    # --- tiny structural constants (resident in VMEM across the whole grid) ---
    ih = jnp.arange(H)
    iw = jnp.arange(W)
    bh = (jnp.abs(ih[:, None] - ih[None, :]) <= pad).astype(jnp.bfloat16)   # (H, H)
    bw = (jnp.abs(iw[:, None] - iw[None, :]) <= pad).astype(jnp.bfloat16)   # (W, W)
    # NOTE: pool is O((H*W)^2) but batch-independent; fine for DropBlock-sized
    # feature maps (<= ~56x56).
    pool = jnp.kron(bh, bw)                                                  # (HW, HW) bf16
    inner = ((ih[:, None] >= pad) & (ih[:, None] < pad + mask_h)
             & (iw[None, :] >= pad) & (iw[None, :] < pad + mask_w))          # (H, W)
    thr_vec = jnp.where(inner, thr, 0).astype(jnp.int32).reshape(1, HW)      # (1, HW)
    seed_arr = jnp.array([seed], dtype=jnp.int32)

    # --- tile size: fill sublanes, keep pool + double-buffered x/out tiles
    # comfortably under the default scoped VMEM (also safe for v7x's 64 MiB). --
    pool_bytes = HW * HW * 2
    budget = 24 * 1024 * 1024
    per_row_bytes = HW * 4 * 2 * 2                     # x + out, double-buffered, f32
    cap = (budget - pool_bytes) // per_row_bytes if budget > pool_bytes else 8
    cap = max(8, (min(512, cap) // 8) * 8)
    if NC <= cap:
        tile_rows, num_tiles = NC, 1
    else:
        tile_rows = cap
        num_tiles = -(-NC // tile_rows)                # trailing tile handled by masking

    est = pool_bytes + 4 * HW + 4 * tile_rows * HW * 4 + (1 << 20)
    vmem_limit = int(est * 1.5) if est > 30 * (1 << 20) else None

    # --- pass 1: count kept elements per tile (reads no large arrays) --------
    counts = pl.pallas_call(
        functools.partial(_count_kernel, tile_rows=tile_rows, hw=HW, nc_total=NC),
        out_shape=jax.ShapeDtypeStruct((num_tiles,), jnp.float32),
        grid=(num_tiles,),
        in_specs=[
            pl.BlockSpec(memory_space=pltpu.MemorySpace.SMEM),      # seed
            pl.BlockSpec((1, HW), lambda i: (0, 0)),                # thr_vec (constant)
            pl.BlockSpec((HW, HW), lambda i: (0, 0)),               # pool    (constant)
        ],
        out_specs=pl.BlockSpec(memory_space=pltpu.MemorySpace.SMEM),  # per-tile counts
        compiler_params=pltpu.CompilerParams(
            dimension_semantics=("arbitrary",), vmem_limit_bytes=vmem_limit),
    )(seed_arr, thr_vec, pool)

    total_keep = jnp.sum(counts)
    scale = (jnp.float32(N * C * H * W) / (jnp.float32(1e-5) + total_keep)).reshape(1)

    # --- pass 2: regenerate the identical mask per tile and apply x*mask*scale
    out2 = pl.pallas_call(
        functools.partial(_apply_kernel, tile_rows=tile_rows, hw=HW),
        out_shape=jax.ShapeDtypeStruct((NC, HW), x.dtype),
        grid=(num_tiles,),
        in_specs=[
            pl.BlockSpec(memory_space=pltpu.MemorySpace.SMEM),      # seed
            pl.BlockSpec(memory_space=pltpu.MemorySpace.SMEM),      # scale
            pl.BlockSpec((1, HW), lambda i: (0, 0)),                # thr_vec (constant)
            pl.BlockSpec((HW, HW), lambda i: (0, 0)),               # pool    (constant)
            pl.BlockSpec((tile_rows, HW), lambda i: (i, 0)),        # x tile
        ],
        out_specs=pl.BlockSpec((tile_rows, HW), lambda i: (i, 0)),
        compiler_params=pltpu.CompilerParams(
            dimension_semantics=("parallel",), vmem_limit_bytes=vmem_limit),
    )(seed_arr, scale, thr_vec, pool, x2)

    return out2.reshape(N, C, H, W)


if __name__ == "__main__":
    key = jax.random.PRNGKey(0)
    x = jax.random.normal(key, (2, 4, 16, 16), dtype=jnp.float32)
    out = dropblock2d(x, p=0.1, block_size=7, seed=42, training=True)
    out = jax.block_until_ready(out)
    assert out.shape == x.shape
    assert bool(jnp.all(jnp.isfinite(out)))
    print("KERNEL_OK")
</pallas_src>

<mosaic_0001>
module attributes {stable_mosaic.version = 11 : i64} {
  func.func @_count_kernel(%arg0: i32, %arg1: memref<1xi32, #tpu.memory_space<smem>>, %arg2: memref<1x256xi32, #tpu.memory_space<vmem>>, %arg3: memref<256x256xbf16, #tpu.memory_space<vmem>>, %arg4: memref<1xf32, #tpu.memory_space<smem>>) attributes {dimension_semantics = [#tpu.dimension_semantics<arbitrary>], iteration_bounds = array<i64: 1>, scalar_prefetch = 0 : i64, scratch_operands = 0 : i64, tpu.core_type = #tpu.core_type<tc>, window_params = [{transform_indices = @transform_0, window_bounds = array<i64: 1>}, {pipeline_mode = #tpu.pipeline_mode<synchronous>, transform_indices = @transform_1, window_bounds = array<i64: 1, 256>}, {pipeline_mode = #tpu.pipeline_mode<synchronous>, transform_indices = @transform_2, window_bounds = array<i64: 256, 256>}, {transform_indices = @transform_3, window_bounds = array<i64: 1>}]} {
    %c0 = arith.constant 0 : index
    %0 = memref.load %arg1[%c0] : memref<1xi32, #tpu.memory_space<smem>>
    %1 = tpu.iota {dimensions = array<i32: 0>} : vector<8x256xi32>
    %2 = tpu.iota {dimensions = array<i32: 1>} : vector<8x256xi32>
    %c8_i32 = arith.constant 8 : i32
    %3 = arith.muli %arg0, %c8_i32 : i32
    %4 = vector.broadcast %3 : i32 to vector<8x256xi32>
    %5 = arith.addi %4, %1 : vector<8x256xi32>
    %c256_i32 = arith.constant 256 : i32
    %6 = vector.broadcast %c256_i32 : i32 to vector<8x256xi32>
    %7 = arith.muli %5, %6 : vector<8x256xi32>
    %8 = arith.addi %7, %2 : vector<8x256xi32>
    %c-1640531527_i32 = arith.constant -1640531527 : i32
    %9 = arith.muli %0, %c-1640531527_i32 : i32
    %10 = vector.broadcast %9 : i32 to vector<8x256xi32>
    %11 = arith.addi %8, %10 : vector<8x256xi32>
    %c16_i32 = arith.constant 16 : i32
    %12 = vector.broadcast %c16_i32 : i32 to vector<8x256xi32>
    %13 = arith.shrui %11, %12 : vector<8x256xi32>
    %14 = arith.xori %11, %13 : vector<8x256xi32>
    %c-2048144789_i32 = arith.constant -2048144789 : i32
    %15 = vector.broadcast %c-2048144789_i32 : i32 to vector<8x256xi32>
    %16 = arith.muli %14, %15 : vector<8x256xi32>
    %c13_i32 = arith.constant 13 : i32
    %17 = vector.broadcast %c13_i32 : i32 to vector<8x256xi32>
    %18 = arith.shrui %16, %17 : vector<8x256xi32>
    %19 = arith.xori %16, %18 : vector<8x256xi32>
    %c-1028477387_i32 = arith.constant -1028477387 : i32
    %20 = vector.broadcast %c-1028477387_i32 : i32 to vector<8x256xi32>
    %21 = arith.muli %19, %20 : vector<8x256xi32>
    %c16_i32_0 = arith.constant 16 : i32
    %22 = vector.broadcast %c16_i32_0 : i32 to vector<8x256xi32>
    %23 = arith.shrui %21, %22 : vector<8x256xi32>
    %24 = arith.xori %21, %23 : vector<8x256xi32>
    %c16777215_i32 = arith.constant 16777215 : i32
    %25 = vector.broadcast %c16777215_i32 : i32 to vector<8x256xi32>
    %26 = arith.andi %24, %25 : vector<8x256xi32>
    %c0_1 = arith.constant 0 : index
    %c0_2 = arith.constant 0 : index
    %27 = vector.load %arg2[%c0_1, %c0_2] : memref<1x256xi32, #tpu.memory_space<vmem>>, vector<1x256xi32>
    %28 = vector.broadcast %27 : vector<1x256xi32> to vector<8x256xi32>
    %29 = arith.cmpi slt, %26, %28 : vector<8x256xi32>
    %30 = arith.extui %29 : vector<8x256xi1> to vector<8x256xi32>
    %31 = arith.sitofp %30 : vector<8x256xi32> to vector<8x256xf32>
    %32 = arith.truncf %31 : vector<8x256xf32> to vector<8x256xbf16>
    %c0_3 = arith.constant 0 : index
    %c0_4 = arith.constant 0 : index
    %33 = vector.load %arg3[%c0_3, %c0_4] : memref<256x256xbf16, #tpu.memory_space<vmem>>, vector<256x256xbf16>
    %cst = arith.constant dense<0.000000e+00> : vector<8x256xf32>
    %34 = tpu.matmul %32, %33, %cst {dimension_numbers = #tpu.dot_dimension_numbers<[1], [0], [0], [1], [0, 0, 1, 1], [], []>} : vector<8x256xbf16>, vector<256x256xbf16>, vector<8x256xf32> -> vector<8x256xf32>
    %cst_5 = arith.constant 5.000000e-01 : f32
    %35 = vector.broadcast %cst_5 : f32 to vector<8x256xf32>
    %36 = arith.cmpf olt, %34, %35 : vector<8x256xf32>
    %37 = tpu.iota {dimensions = array<i32: 0>} : vector<8x256xi32>
    %c8_i32_6 = arith.constant 8 : i32
    %38 = arith.muli %arg0, %c8_i32_6 : i32
    %39 = vector.broadcast %38 : i32 to vector<8x256xi32>
    %40 = arith.addi %39, %37 : vector<8x256xi32>
    %c8_i32_7 = arith.constant 8 : i32
    %41 = vector.broadcast %c8_i32_7 : i32 to vector<8x256xi32>
    %42 = arith.cmpi slt, %40, %41 : vector<8x256xi32>
    %43 = arith.andi %36, %42 : vector<8x256xi1>
    %cst_8 = arith.constant 1.000000e+00 : f32
    %cst_9 = arith.constant 0.000000e+00 : f32
    %44 = vector.broadcast %cst_8 : f32 to vector<8x256xf32>
    %45 = vector.broadcast %cst_9 : f32 to vector<8x256xf32>
    %46 = arith.select %43, %44, %45 : vector<8x256xi1>, vector<8x256xf32>
    %47 = vector.shape_cast %46 : vector<8x256xf32> to vector<1x8x256xf32>
    %cst_10 = arith.constant dense<0.000000e+00> : vector<1xf32>
    %48 = vector.multi_reduction <add>, %47, %cst_10 [1, 2] : vector<1x8x256xf32> to vector<1xf32>
    %49 = vector.shape_cast %48 : vector<1xf32> to vector<1x1x1xf32>
    %50 = vector.extract %49[0, 0, 0] : f32 from vector<1x1x1xf32>
    %51 = arith.index_cast %arg0 : i32 to index
    %52 = memref.load %arg4[%51] : memref<1xf32, #tpu.memory_space<smem>>
    memref.store %50, %arg4[%51] : memref<1xf32, #tpu.memory_space<smem>>
    return
  }
  func.func @transform_0(%arg0: i32) -> i32 {
    %c0_i32 = arith.constant 0 : i32
    %c0_i32_0 = arith.constant 0 : i32
    return %c0_i32 : i32
  }
  func.func @transform_1(%arg0: i32) -> (i32, i32) {
    %c0_i32 = arith.constant 0 : i32
    %c0_i32_0 = arith.constant 0 : i32
    %c0_i32_1 = arith.constant 0 : i32
    return %c0_i32, %c0_i32_0 : i32, i32
  }
  func.func @transform_2(%arg0: i32) -> (i32, i32) {
    %c0_i32 = arith.constant 0 : i32
    %c0_i32_0 = arith.constant 0 : i32
    %c0_i32_1 = arith.constant 0 : i32
    return %c0_i32, %c0_i32_0 : i32, i32
  }
  func.func @transform_3(%arg0: i32) -> i32 {
    %c0_i32 = arith.constant 0 : i32
    %c0_i32_0 = arith.constant 0 : i32
    return %c0_i32 : i32
  }
}

</mosaic_0001>

<llo_original>
// kernel: tpu_custom_call.1
$region0: #{tpu_custom_call.1}
  #allocation0 [shape = 'u32[]', space=smem, size = 0x4, offset = 0x4, fixed_abs, tag = 'smem constant byte address 0x4 - core index']
  #allocation1 [shape = 'u32[72,128]{1,0:T(1,128)}', space=vmem, size = 0x9000, scoped, tag = 'internal scratch']
  #allocation2 [shape = 's32[1]{0:T(128)S(6)}', space=smem, size = 0x200, scoped, tag = 'scoped memory for tpu_custom_call.1']
  %s0 = inlined_call_operand.<no memory space> [shape: s32[1], index: 0, kind: input, shape index: {}]
  %s1 = inlined_call_operand.vmem [shape: s32[1,256], index: 1, kind: input, shape index: {}]
  %s2 = inlined_call_operand.hbm [shape: bf16[256,256], index: 2, kind: input, shape index: {}]
  %s3 = inlined_call_operand.hbm [shape: f32[1], index: 3, kind: output, shape index: {}]
  %s4 = sld [smem:[#allocation0]]
  $region26: #{tpu_custom_call.1} parent=0
    _
  %s6 = ssub.s32 1, %s4
  %s7 = scalar_select 0, %s6, %s4
  %8 = sst [smem:[#allocation2]] %s0
  $region1: #{tpu_custom_call.1} parent=0
    #allocation3 [shape = 'u8[131072]{0}', space=vmem, size = 0x20000, scoped, tag = 'input window, operand 2, single buffered']
    #allocation4 [shape = 's32[1]{0}', space=sflag, size = 0x4, scoped, tag = 'scoped memory for tpu_custom_call.1']
    #allocation5 [shape = 's32[1]{0}', space=sflag, size = 0x4, scoped, tag = 'scoped memory for tpu_custom_call.1']
    #allocation6 [shape = 'u8[512]{0}', space=smem, size = 0x200, scoped, tag = 'output window, operand 0, single buffered']
    %9 = vsyncpa [#allocation4], 0
    %10 = vsyncpa [#allocation5], 0
    // Predicated region
    $region2: #{tpu_custom_call.1} parent=1 // pred_check
      _
    $region3: #{tpu_custom_call.1} parent=1 // pred_check_branch
      %12 = sbr.rel (0) target = $region5
    $region4: #{tpu_custom_call.1} parent=1 // pred_region
      _
    $region5: #{tpu_custom_call.1} parent=1 // pred_fallthru
      _
    // Predicated region
    $region6: #{tpu_custom_call.1} parent=1 // pred_check
      _
    $region7: #{tpu_custom_call.1} parent=1 // pred_check_branch
      %14 = sbr.rel (0) target = $region9
    $region8: #{tpu_custom_call.1} parent=1 // pred_region
      _
    $region9: #{tpu_custom_call.1} parent=1 // pred_fallthru
      _
    // Predicated region
    $region10: #{tpu_custom_call.1} parent=1 // pred_check
      _
    $region11: #{tpu_custom_call.1} parent=1 // pred_check_branch
      %16 = sbr.rel (0) target = $region13
    $region12: #{tpu_custom_call.1} parent=1 // pred_region
      %18 = vsyncadd [#allocation4], 0
      %s19 = sshll.u32 %s2, 4
      %s20 = int_to_ptr.hbm [resolvable:$true] %s19
      %s21 = sshll.u32 [#allocation3], 4
      %s22 = int_to_ptr.vmem [resolvable:$true] %s21
      %27 = dma.hbm_to_vmem [thread:$0]  %s20, 4096, %s22, [#allocation4], 128, 128, 8
    $region13: #{tpu_custom_call.1} parent=1 // pred_fallthru
      _
    // Predicated region
    $region14: #{tpu_custom_call.1} parent=1 // pred_check
      _
    $region15: #{tpu_custom_call.1} parent=1 // pred_check_branch
      %29 = sbr.rel (0) target = $region17
    $region16: #{tpu_custom_call.1} parent=1 // pred_region
      %31 = dma.done [#allocation4], 4096
    $region17: #{tpu_custom_call.1} parent=1 // pred_fallthru
      _
    %s32 = sld [smem:[#allocation2]]
    %v33 = vlaneseq
    %v34 = vshrl.u32 %v33, 7
    %v35 = vlaneseq
    %v36 = vand.u32 %v35, 127
    %v37 = vadd.s32 %v36, 128
    %s38 = smul.u32 0, 8
    %v39 = vstv %s38
    %v40 = vadd.s32 %v39, %v34
    %v41 = vmul.u32 %v40, 256
    %v42 = vadd.s32 %v41, %v36
    %v43 = vadd.s32 %v41, %v37
    %s44 = smul.u32 %s32, 2654435769
    %v45 = vstv %s44
    %v46 = vadd.s32 %v42, %v45
    %v47 = vadd.s32 %v43, %v45
    %v48 = vshrl.u32 %v46, 16
    %v49 = vshrl.u32 %v47, 16
    %v50 = vxor.u32 %v46, %v48
    %v51 = vxor.u32 %v47, %v49
    %v52 = vmul.u32 %v50, 2246822507
    %v53 = vmul.u32 %v51, 2246822507
    %v54 = vshrl.u32 %v52, 13
    %v55 = vshrl.u32 %v53, 13
    %v56 = vxor.u32 %v52, %v54
    %v57 = vxor.u32 %v53, %v55
    %v58 = vmul.u32 %v56, 3266489909
    %v59 = vmul.u32 %v57, 3266489909
    %v60 = vshrl.u32 %v58, 16
    %v61 = vshrl.u32 %v59, 16
    %v62 = vxor.u32 %v58, %v60
    %v63 = vxor.u32 %v59, %v61
    %v64 = vand.u32 %v62, 16777215
    %v65 = vand.u32 %v63, 16777215
    %v66 = vld [vmem:[%s1] sm:$0x3]
    %v67 = vperm.slane %v66, 0
    %v68 = vperm.slane %v66, 1
    %vm69 = vcmp.lt.s32.totalorder %v64, %v67
    %vm70 = vcmp.lt.s32.totalorder %v65, %v68
    %v71 = vsel %vm69, 1, 0
    %v72 = vsel %vm70, 1, 0
    %v73 = vcvt.s32.f32 %v71
    %v74 = vcvt.s32.f32 %v72
    %v75 = vpack.c.bf16 %v73, %v73
    %v76 = vpack.c.bf16 %v74, %v74
    %v77 = vld [vmem:[#allocation3] sm:$0xff]
    %v78 = vld [vmem:[#allocation3 + $0x8] sm:$0xff]
    %v79 = vld [vmem:[#allocation3 + $0x10] sm:$0xff]
    %v80 = vld [vmem:[#allocation3 + $0x18] sm:$0xff]
    %v81 = vld [vmem:[#allocation3 + $0x20] sm:$0xff]
    %v82 = vld [vmem:[#allocation3 + $0x28] sm:$0xff]
    %v83 = vld [vmem:[#allocation3 + $0x30] sm:$0xff]
    %v84 = vld [vmem:[#allocation3 + $0x38] sm:$0xff]
    %v85 = vld [vmem:[#allocation3 + $0x40] sm:$0xff]
    %v86 = vld [vmem:[#allocation3 + $0x48] sm:$0xff]
    %v87 = vld [vmem:[#allocation3 + $0x50] sm:$0xff]
    %v88 = vld [vmem:[#allocation3 + $0x58] sm:$0xff]
    %v89 = vld [vmem:[#allocation3 + $0x60] sm:$0xff]
    %v90 = vld [vmem:[#allocation3 + $0x68] sm:$0xff]
    %v91 = vld [vmem:[#allocation3 + $0x70] sm:$0xff]
    %v92 = vld [vmem:[#allocation3 + $0x78] sm:$0xff]
    %v93 = vld [vmem:[#allocation3 + $0x80] sm:$0xff]
    %v94 = vld [vmem:[#allocation3 + $0x88] sm:$0xff]
    %v95 = vld [vmem:[#allocation3 + $0x90] sm:$0xff]
    %v96 = vld [vmem:[#allocation3 + $0x98] sm:$0xff]
    %v97 = vld [vmem:[#allocation3 + $0xa0] sm:$0xff]
    %v98 = vld [vmem:[#allocation3 + $0xa8] sm:$0xff]
    %v99 = vld [vmem:[#allocation3 + $0xb0] sm:$0xff]
    %v100 = vld [vmem:[#allocation3 + $0xb8] sm:$0xff]
    %v101 = vld [vmem:[#allocation3 + $0xc0] sm:$0xff]
    %v102 = vld [vmem:[#allocation3 + $0xc8] sm:$0xff]
    %v103 = vld [vmem:[#allocation3 + $0xd0] sm:$0xff]
    %v104 = vld [vmem:[#allocation3 + $0xd8] sm:$0xff]
    %v105 = vld [vmem:[#allocation3 + $0xe0] sm:$0xff]
    %v106 = vld [vmem:[#allocation3 + $0xe8] sm:$0xff]
    %v107 = vld [vmem:[#allocation3 + $0xf0] sm:$0xff]
    %v108 = vld [vmem:[#allocation3 + $0xf8] sm:$0xff]
    %v141 = vunpack.c.l.b16 %v77
    %v142 = vunpack.c.h.b16 %v77
    %v143 = vunpack.c.l.b16 %v78
    %v144 = vunpack.c.h.b16 %v78
    %v145 = vunpack.c.l.b16 %v79
    %v146 = vunpack.c.h.b16 %v79
    %v147 = vunpack.c.l.b16 %v80
    %v148 = vunpack.c.h.b16 %v80
    %v149 = vunpack.c.l.b16 %v81
    %v150 = vunpack.c.h.b16 %v81
    %v151 = vunpack.c.l.b16 %v82
    %v152 = vunpack.c.h.b16 %v82
    %v153 = vunpack.c.l.b16 %v83
    %v154 = vunpack.c.h.b16 %v83
    %v155 = vunpack.c.l.b16 %v84
    %v156 = vunpack.c.h.b16 %v84
    %v157 = vunpack.c.l.b16 %v85
    %v158 = vunpack.c.h.b16 %v85
    %v159 = vunpack.c.l.b16 %v86
    %v160 = vunpack.c.h.b16 %v86
    %v161 = vunpack.c.l.b16 %v87
    %v162 = vunpack.c.h.b16 %v87
    %v163 = vunpack.c.l.b16 %v88
    %v164 = vunpack.c.h.b16 %v88
    %v165 = vunpack.c.l.b16 %v89
    %v166 = vunpack.c.h.b16 %v89
    %v167 = vunpack.c.l.b16 %v90
    %v168 = vunpack.c.h.b16 %v90
    %v169 = vunpack.c.l.b16 %v91
    %v170 = vunpack.c.h.b16 %v91
    %v171 = vunpack.c.l.b16 %v92
    %v172 = vunpack.c.h.b16 %v92
    %v173 = vunpack.c.l.b16 %v93
    %v174 = vunpack.c.h.b16 %v93
    %v175 = vunpack.c.l.b16 %v94
    %v176 = vunpack.c.h.b16 %v94
    %v177 = vunpack.c.l.b16 %v95
    %v178 = vunpack.c.h.b16 %v95
    %v179 = vunpack.c.l.b16 %v96
    %v180 = vunpack.c.h.b16 %v96
    %v181 = vunpack.c.l.b16 %v97
    %v182 = vunpack.c.h.b16 %v97
    %v183 = vunpack.c.l.b16 %v98
    %v184 = vunpack.c.h.b16 %v98
    %v185 = vunpack.c.l.b16 %v99
    %v186 = vunpack.c.h.b16 %v99
    %v187 = vunpack.c.l.b16 %v100
    %v188 = vunpack.c.h.b16 %v100
    %v189 = vunpack.c.l.b16 %v101
    %v190 = vunpack.c.h.b16 %v101
    %v191 = vunpack.c.l.b16 %v102
    %v192 = vunpack.c.h.b16 %v102
    %v193 = vunpack.c.l.b16 %v103
    %v194 = vunpack.c.h.b16 %v103
    %v195 = vunpack.c.l.b16 %v104
    %v196 = vunpack.c.h.b16 %v104
    %v197 = vunpack.c.l.b16 %v105
    %v198 = vunpack.c.h.b16 %v105
    %v199 = vunpack.c.l.b16 %v106
    %v200 = vunpack.c.h.b16 %v106
    %v201 = vunpack.c.l.b16 %v107
    %v202 = vunpack.c.h.b16 %v107
    %v203 = vunpack.c.l.b16 %v108
    %v204 = vunpack.c.h.b16 %v108
    %v205 = vpack.c.b16 %v143, %v141
    %v206 = vpack.c.b16 %v144, %v142
    %v207 = vpack.c.b16 %v147, %v145
    %v208 = vpack.c.b16 %v148, %v146
    %v209 = vpack.c.b16 %v151, %v149
    %v210 = vpack.c.b16 %v152, %v150
    %v211 = vpack.c.b16 %v155, %v153
    %v212 = vpack.c.b16 %v156, %v154
    %v213 = vpack.c.b16 %v159, %v157
    %v214 = vpack.c.b16 %v160, %v158
    %v215 = vpack.c.b16 %v163, %v161
    %v216 = vpack.c.b16 %v164, %v162
    %v217 = vpack.c.b16 %v167, %v165
    %v218 = vpack.c.b16 %v168, %v166
    %v219 = vpack.c.b16 %v171, %v169
    %v220 = vpack.c.b16 %v172, %v170
    %v221 = vpack.c.b16 %v175, %v173
    %v222 = vpack.c.b16 %v176, %v174
    %v223 = vpack.c.b16 %v179, %v177
    %v224 = vpack.c.b16 %v180, %v178
    %v225 = vpack.c.b16 %v183, %v181
    %v226 = vpack.c.b16 %v184, %v182
    %v227 = vpack.c.b16 %v187, %v185
    %v228 = vpack.c.b16 %v188, %v186
    %v229 = vpack.c.b16 %v191, %v189
    %v230 = vpack.c.b16 %v192, %v190
    %v231 = vpack.c.b16 %v195, %v193
    %v232 = vpack.c.b16 %v196, %v194
    %v233 = vpack.c.b16 %v199, %v197
    %v234 = vpack.c.b16 %v200, %v198
    %v235 = vpack.c.b16 %v203, %v201
    %v236 = vpack.c.b16 %v204, %v202
    %269 = vmatpush.bf16.msra.mxu0 %v219
    %270 = vmatpush.bf16.msra.mxu0 %v217
    %271 = vmatpush.bf16.msra.mxu0 %v215
    %272 = vmatpush.bf16.msra.mxu0 %v213
    %273 = vmatpush.bf16.msra.mxu0 %v211
    %274 = vmatpush.bf16.msra.mxu0 %v209
    %275 = vmatpush.bf16.msra.mxu0 %v207
    %276 = vmatpush.bf16.msra.mxu0 %v205
    %277 = vmatmul.bf16.gmra.mxu0 %v75
    %v278 = vpop.f32.mrf.mxu0
    %v279 = vadd.f32 0.0, %v278
    %v280 = vpop.f32.mrf.mxu0
    %281 = vdwg.mxu0
    %282 = vmatpush.bf16.msra.mxu0 %v235
    %283 = vmatpush.bf16.msra.mxu0 %v233
    %284 = vmatpush.bf16.msra.mxu0 %v231
    %285 = vmatpush.bf16.msra.mxu0 %v229
    %286 = vmatpush.bf16.msra.mxu0 %v227
    %287 = vmatpush.bf16.msra.mxu0 %v225
    %288 = vmatpush.bf16.msra.mxu0 %v223
    %289 = vmatpush.bf16.msra.mxu0 %v221
    %290 = vmatmul.bf16.gmra.mxu0 %v76
    %v291 = vpop.f32.mrf.mxu0
    %v292 = vadd.f32 %v279, %v291
    %v293 = vpop.f32.mrf.mxu0
    %294 = vdwg.mxu0
    %295 = vmatpush.bf16.msra.mxu0 %v220
    %296 = vmatpush.bf16.msra.mxu0 %v218
    %297 = vmatpush.bf16.msra.mxu0 %v216
    %298 = vmatpush.bf16.msra.mxu0 %v214
    %299 = vmatpush.bf16.msra.mxu0 %v212
    %300 = vmatpush.bf16.msra.mxu0 %v210
    %301 = vmatpush.bf16.msra.mxu0 %v208
    %302 = vmatpush.bf16.msra.mxu0 %v206
    %303 = vmatmul.bf16.gmra.mxu0 %v75
    %v304 = vpop.f32.mrf.mxu0
    %v305 = vadd.f32 0.0, %v304
    %v306 = vpop.f32.mrf.mxu0
    %307 = vdwg.mxu0
    %308 = vmatpush.bf16.msra.mxu0 %v236
    %309 = vmatpush.bf16.msra.mxu0 %v234
    %310 = vmatpush.bf16.msra.mxu0 %v232
    %311 = vmatpush.bf16.msra.mxu0 %v230
    %312 = vmatpush.bf16.msra.mxu0 %v228
    %313 = vmatpush.bf16.msra.mxu0 %v226
    %314 = vmatpush.bf16.msra.mxu0 %v224
    %315 = vmatpush.bf16.msra.mxu0 %v222
    %316 = vmatmul.bf16.gmra.mxu0 %v76
    %v317 = vpop.f32.mrf.mxu0
    %v318 = vadd.f32 %v305, %v317
    %v319 = vpop.f32.mrf.mxu0
    %320 = vdwg.mxu0
    %vm321 = vcmp.lt.f32.partialorder %v292, 0.5
    %vm322 = vcmp.lt.f32.partialorder %v318, 0.5
    %vm323 = vcmp.lt.s32.totalorder %v40, 8
    %vm324 = vmand %vm321, %vm323
    %vm325 = vmand %vm322, %vm323
    %v326 = vsel %vm324, 1.0, 0.0
    %v327 = vsel %vm325, 1.0, 0.0
    %v328 = vadd.f32 %v326, %v327
    %329 = vadd.xlane.f32.xlu0 %v328
    %v330 = vpop.xlane.xlu0 %329
    %v331 = vrot.slane %v330, 4
    %v332 = vadd.f32 %v330, %v331
    %v333 = vrot.slane %v332, 2
    %v334 = vadd.f32 %v332, %v333
    %v335 = vrot.slane %v334, 1
    %v336 = vadd.f32 %v334, %v335
    %s337 = vtos %v336
    %s338 = scalar_lea.smem [#allocation6], 0
    %339 = sst [smem:[%s338]] %s337
    // Predicated region
    $region18: #{tpu_custom_call.1} parent=1 // pred_check
      _
    $region19: #{tpu_custom_call.1} parent=1 // pred_check_branch
      %341 = sbr.rel (0) target = $region21
    $region20: #{tpu_custom_call.1} parent=1 // pred_region
      %343 = vsyncadd [#allocation5], 0
      %s345 = sshll.u32 %s3, 4
      %s346 = int_to_ptr.hbm [resolvable:$true] %s345
      %348 = dma.smem_to_hbm [#allocation6], 16, %s346, [#allocation5]
    $region21: #{tpu_custom_call.1} parent=1 // pred_fallthru
      _
    // Predicated region
    $region22: #{tpu_custom_call.1} parent=1 // pred_check
      _
    $region23: #{tpu_custom_call.1} parent=1 // pred_check_branch
      %350 = sbr.rel (0) target = $region25
    $region24: #{tpu_custom_call.1} parent=1 // pred_region
      %352 = dma.done [#allocation5], 16
    $region25: #{tpu_custom_call.1} parent=1 // pred_fallthru
      _
    %353 = sfence
    %354 = vsyncpa [#allocation4], 1
    %355 = vsyncpa [#allocation5], 1

</llo_original>
